<compile_context>
chip_gen: v7x
topology: tpu7x:2x2x1
jax: 0.10.0
libtpu: 0.0.40
codegen_flags: <defaults>
</compile_context>

<pallas_src>
import jax
import jax.numpy as jnp
from jax.experimental import pallas as pl
from jax.experimental.pallas import tpu as pltpu


EPS = 1e-5
IN_FEAT = 3
HID = 10
N_COPIES = 4
OUT_FEAT = N_COPIES * HID  # 40


def _model_kernel(x_ref, p_ref, out_ref):
    # x_ref : SMEM (N, 3) float32 (read as scalars -> sreg splats)
    # p_ref : VMEM (8, 128) float32 packed params:
    #   rows 0..2, cols 0:40 -> W rows, each pre-tiled 4x along lanes
    #   row  3,    cols 0:40 -> b, pre-tiled 4x
    #   row  4,    cols 0:40 -> gamma
    #   row  5,    cols 0:40 -> beta
    # out_ref: VMEM (N, 40) float32
    w0 = p_ref[0:1, 0:OUT_FEAT]                       # (1, 40)
    w1 = p_ref[1:2, 0:OUT_FEAT]
    w2 = p_ref[2:3, 0:OUT_FEAT]
    b = p_ref[3:4, 0:OUT_FEAT]
    gamma = p_ref[4:5, 0:OUT_FEAT]
    beta = p_ref[5:6, 0:OUT_FEAT]

    n = out_ref.shape[0]
    inv_n = 1.0 / float(n)

    # Linear (+ folded cat): K=3 unrolled VPU FMA per row, scalar splats from
    # SMEM. Each row is a single lane-dense (1, 40) vreg row.
    rows = []
    y_sum = None
    for i in range(n):
        yi = (x_ref[i, 0] * w0 + x_ref[i, 1] * w1 + x_ref[i, 2] * w2) + b
        rows.append(yi)
        y_sum = yi if y_sum is None else y_sum + yi

    # BatchNorm training-mode statistics over the batch axis (two-pass,
    # biased variance), all on 40 lanes (still a single vreg row).
    mean = y_sum * inv_n                              # (1, 40)
    sq_sum = None
    for i in range(n):
        d = rows[i] - mean
        dd = d * d
        sq_sum = dd if sq_sum is None else sq_sum + dd
    var = jnp.maximum(sq_sum * inv_n, 0.0)            # (1, 40)
    inv_std = jax.lax.rsqrt(var + EPS)                # EUP

    # Fold affine: one FMA + one lane-dense store per output row.
    scale = gamma * inv_std
    shift = beta - mean * scale
    for i in range(n):
        out_ref[i:i + 1, :] = rows[i] * scale + shift


def pack_params(w, b, gamma, beta):
    """Pack all parameters (with the 4x cat pre-folded into W/b) into a single
    (8, 128) f32 block. Called ONCE at init -- not on the per-call path."""
    w = jnp.asarray(w, jnp.float32).reshape(IN_FEAT, HID)
    b = jnp.asarray(b, jnp.float32).reshape(HID)
    gamma = jnp.asarray(gamma, jnp.float32).reshape(OUT_FEAT)
    beta = jnp.asarray(beta, jnp.float32).reshape(OUT_FEAT)
    w4 = jnp.tile(w, (1, N_COPIES))                   # (3, 40)
    b4 = jnp.tile(b, (N_COPIES,))                     # (40,)
    p = jnp.zeros((8, 128), dtype=jnp.float32)
    p = p.at[0:IN_FEAT, 0:OUT_FEAT].set(w4)
    p = p.at[IN_FEAT, 0:OUT_FEAT].set(b4)
    p = p.at[IN_FEAT + 1, 0:OUT_FEAT].set(gamma)
    p = p.at[IN_FEAT + 2, 0:OUT_FEAT].set(beta)
    return p


@jax.jit
def model_forward(x, params):
    n = x.shape[0]
    return pl.pallas_call(
        _model_kernel,
        out_shape=jax.ShapeDtypeStruct((n, OUT_FEAT), jnp.float32),
        # Tiny arrays; no grid. x in SMEM (scalar consumption), params/out in
        # VMEM as full-array blocks.
        in_specs=[
            pl.BlockSpec(memory_space=pltpu.MemorySpace.SMEM),  # x (N, 3)
            pl.BlockSpec(memory_space=pltpu.MemorySpace.VMEM),  # params (8,128)
        ],
        out_specs=pl.BlockSpec(memory_space=pltpu.MemorySpace.VMEM),
    )(x, params)


def _reference(x, w, b, gamma, beta):
    y = x @ w + b
    z = jnp.concatenate([y, y, y, y], axis=1)
    mean = jnp.mean(z, axis=0, keepdims=True)
    var = jnp.mean((z - mean) ** 2, axis=0, keepdims=True)
    return (z - mean) / jnp.sqrt(var + EPS) * gamma + beta


if __name__ == "__main__":
    key = jax.random.PRNGKey(0)
    k_x, k_w, k_b = jax.random.split(key, 3)

    # Input consistent with the module: x = torch.randn(2, 3)
    x = jax.random.normal(k_x, (2, IN_FEAT), dtype=jnp.float32)

    # Deterministic Linear(3, 10) params (PyTorch-style uniform init bound).
    # Layout here is (in, out); loading real PyTorch weights ((out, in)) would
    # require a transpose in the wrapper.
    bound = 1.0 / jnp.sqrt(jnp.float32(IN_FEAT))
    w = jax.random.uniform(k_w, (IN_FEAT, HID), jnp.float32, -bound, bound)
    b = jax.random.uniform(k_b, (1, HID), jnp.float32, -bound, bound)

    # BatchNorm affine params (default init: gamma=1, beta=0) over 40 features.
    gamma = jnp.ones((1, OUT_FEAT), dtype=jnp.float32)
    beta = jnp.zeros((1, OUT_FEAT), dtype=jnp.float32)

    # Pack once (init-time), then call the jitted wrapper.
    params = pack_params(w, b, gamma, beta)
    params = jax.block_until_ready(params)

    out = model_forward(x, params)
    out = jax.block_until_ready(out)

    ref = _reference(x, w, b, gamma, beta)
    assert out.shape == (2, OUT_FEAT), out.shape
    assert jnp.allclose(out, ref, atol=1e-3, rtol=1e-3), "mismatch vs reference"
    print("KERNEL_OK")
</pallas_src>

<mosaic_0001>
module attributes {stable_mosaic.version = 11 : i64} {
  func.func @_model_kernel(%arg0: memref<2x3xf32, #tpu.memory_space<smem>>, %arg1: memref<8x128xf32, #tpu.memory_space<vmem>>, %arg2: memref<2x40xf32, #tpu.memory_space<vmem>>) attributes {dimension_semantics = [], scalar_prefetch = 0 : i64, scratch_operands = 0 : i64, tpu.core_type = #tpu.core_type<tc>} {
    %c0 = arith.constant 0 : index
    %c0_0 = arith.constant 0 : index
    %0 = vector.load %arg1[%c0, %c0_0] : memref<8x128xf32, #tpu.memory_space<vmem>>, vector<1x40xf32>
    %c1 = arith.constant 1 : index
    %c0_1 = arith.constant 0 : index
    %1 = vector.load %arg1[%c1, %c0_1] : memref<8x128xf32, #tpu.memory_space<vmem>>, vector<1x40xf32>
    %c2 = arith.constant 2 : index
    %c0_2 = arith.constant 0 : index
    %2 = vector.load %arg1[%c2, %c0_2] : memref<8x128xf32, #tpu.memory_space<vmem>>, vector<1x40xf32>
    %c3 = arith.constant 3 : index
    %c0_3 = arith.constant 0 : index
    %3 = vector.load %arg1[%c3, %c0_3] : memref<8x128xf32, #tpu.memory_space<vmem>>, vector<1x40xf32>
    %c4 = arith.constant 4 : index
    %c0_4 = arith.constant 0 : index
    %4 = vector.load %arg1[%c4, %c0_4] : memref<8x128xf32, #tpu.memory_space<vmem>>, vector<1x40xf32>
    %c5 = arith.constant 5 : index
    %c0_5 = arith.constant 0 : index
    %5 = vector.load %arg1[%c5, %c0_5] : memref<8x128xf32, #tpu.memory_space<vmem>>, vector<1x40xf32>
    %c0_6 = arith.constant 0 : index
    %c0_7 = arith.constant 0 : index
    %6 = memref.load %arg0[%c0_6, %c0_7] : memref<2x3xf32, #tpu.memory_space<smem>>
    %7 = vector.broadcast %6 : f32 to vector<1x40xf32>
    %8 = arith.mulf %7, %0 : vector<1x40xf32>
    %c0_8 = arith.constant 0 : index
    %c1_9 = arith.constant 1 : index
    %9 = memref.load %arg0[%c0_8, %c1_9] : memref<2x3xf32, #tpu.memory_space<smem>>
    %10 = vector.broadcast %9 : f32 to vector<1x40xf32>
    %11 = arith.mulf %10, %1 : vector<1x40xf32>
    %12 = arith.addf %8, %11 : vector<1x40xf32>
    %c0_10 = arith.constant 0 : index
    %c2_11 = arith.constant 2 : index
    %13 = memref.load %arg0[%c0_10, %c2_11] : memref<2x3xf32, #tpu.memory_space<smem>>
    %14 = vector.broadcast %13 : f32 to vector<1x40xf32>
    %15 = arith.mulf %14, %2 : vector<1x40xf32>
    %16 = arith.addf %12, %15 : vector<1x40xf32>
    %17 = arith.addf %16, %3 : vector<1x40xf32>
    %c1_12 = arith.constant 1 : index
    %c0_13 = arith.constant 0 : index
    %18 = memref.load %arg0[%c1_12, %c0_13] : memref<2x3xf32, #tpu.memory_space<smem>>
    %19 = vector.broadcast %18 : f32 to vector<1x40xf32>
    %20 = arith.mulf %19, %0 : vector<1x40xf32>
    %c1_14 = arith.constant 1 : index
    %c1_15 = arith.constant 1 : index
    %21 = memref.load %arg0[%c1_14, %c1_15] : memref<2x3xf32, #tpu.memory_space<smem>>
    %22 = vector.broadcast %21 : f32 to vector<1x40xf32>
    %23 = arith.mulf %22, %1 : vector<1x40xf32>
    %24 = arith.addf %20, %23 : vector<1x40xf32>
    %c1_16 = arith.constant 1 : index
    %c2_17 = arith.constant 2 : index
    %25 = memref.load %arg0[%c1_16, %c2_17] : memref<2x3xf32, #tpu.memory_space<smem>>
    %26 = vector.broadcast %25 : f32 to vector<1x40xf32>
    %27 = arith.mulf %26, %2 : vector<1x40xf32>
    %28 = arith.addf %24, %27 : vector<1x40xf32>
    %29 = arith.addf %28, %3 : vector<1x40xf32>
    %30 = arith.addf %17, %29 : vector<1x40xf32>
    %cst = arith.constant 5.000000e-01 : f32
    %31 = vector.broadcast %cst : f32 to vector<1x40xf32>
    %32 = arith.mulf %30, %31 : vector<1x40xf32>
    %33 = arith.subf %17, %32 : vector<1x40xf32>
    %34 = arith.mulf %33, %33 : vector<1x40xf32>
    %35 = arith.subf %29, %32 : vector<1x40xf32>
    %36 = arith.mulf %35, %35 : vector<1x40xf32>
    %37 = arith.addf %34, %36 : vector<1x40xf32>
    %cst_18 = arith.constant 5.000000e-01 : f32
    %38 = vector.broadcast %cst_18 : f32 to vector<1x40xf32>
    %39 = arith.mulf %37, %38 : vector<1x40xf32>
    %cst_19 = arith.constant 0.000000e+00 : f32
    %40 = vector.broadcast %cst_19 : f32 to vector<1x40xf32>
    %41 = arith.maximumf %39, %40 : vector<1x40xf32>
    %cst_20 = arith.constant 9.99999974E-6 : f32
    %42 = vector.broadcast %cst_20 : f32 to vector<1x40xf32>
    %43 = arith.addf %41, %42 : vector<1x40xf32>
    %44 = math.rsqrt %43 : vector<1x40xf32>
    %45 = arith.mulf %4, %44 : vector<1x40xf32>
    %46 = arith.mulf %32, %45 : vector<1x40xf32>
    %47 = arith.subf %5, %46 : vector<1x40xf32>
    %48 = arith.mulf %17, %45 : vector<1x40xf32>
    %49 = arith.addf %48, %47 : vector<1x40xf32>
    %c0_21 = arith.constant 0 : index
    %c0_22 = arith.constant 0 : index
    %50 = vector.load %arg2[%c0_21, %c0_22] : memref<2x40xf32, #tpu.memory_space<vmem>>, vector<1x40xf32>
    tpu.vector_store %arg2[%c0_21, %c0_22], %49 {strides = array<i32>} : memref<2x40xf32, #tpu.memory_space<vmem>>, vector<1x40xf32>,
    %51 = arith.mulf %29, %45 : vector<1x40xf32>
    %52 = arith.addf %51, %47 : vector<1x40xf32>
    %c1_23 = arith.constant 1 : index
    %c0_24 = arith.constant 0 : index
    %53 = vector.load %arg2[%c1_23, %c0_24] : memref<2x40xf32, #tpu.memory_space<vmem>>, vector<1x40xf32>
    tpu.vector_store %arg2[%c1_23, %c0_24], %52 {strides = array<i32>} : memref<2x40xf32, #tpu.memory_space<vmem>>, vector<1x40xf32>,
    return
  }
}

</mosaic_0001>

<llo_original>
// kernel: model_forward.1
$region0: #{model_forward.1}
  #allocation0 [shape = 'u32[]', space=smem, size = 0x4, offset = 0x4, fixed_abs, tag = 'smem constant byte address 0x4 - core index']
  #allocation1 [shape = 'u32[144,128]{1,0:T(1,128)}', space=vmem, size = 0x12000, scoped, tag = 'internal scratch']
  %s0 = inlined_call_operand.hbm [shape: f32[2,3], index: 0, kind: input, shape index: {}]
  %s1 = inlined_call_operand.hbm [shape: f32[8,128], index: 1, kind: input, shape index: {}]
  %s2 = inlined_call_operand.hbm [shape: f32[2,40], index: 2, kind: output, shape index: {}]
  %s3 = sld [smem:[#allocation0]]
  $region26: #{model_forward.1} parent=0
    _
  %s5 = ssub.s32 1, %s3
  %s6 = scalar_select 0, %s5, %s3
  $region1: #{model_forward.1} parent=0
    #allocation2 [shape = 'u8[1024]{0}', space=smem, size = 0x400, scoped, tag = 'input window, operand 0, single buffered']
    #allocation3 [shape = 's32[1]{0}', space=sflag, size = 0x4, scoped, tag = 'scoped memory for model_forward.1']
    #allocation4 [shape = 's32[1]{0}', space=sflag, size = 0x4, scoped, tag = 'scoped memory for model_forward.1']
    #allocation5 [shape = 's32[1]{0}', space=sflag, size = 0x4, scoped, tag = 'scoped memory for model_forward.1']
    #allocation6 [shape = 'u8[4096]{0}', space=vmem, size = 0x1000, scoped, tag = 'input window, operand 1, single buffered']
    #allocation7 [shape = 'u8[1024]{0}', space=vmem, size = 0x400, scoped, tag = 'output window, operand 0, single buffered']
    %7 = vsyncpa [#allocation5], 0
    %8 = vsyncpa [#allocation3], 0
    %9 = vsyncpa [#allocation4], 0
    // Predicated region
    $region2: #{model_forward.1} parent=1 // pred_check
      _
    $region3: #{model_forward.1} parent=1 // pred_check_branch
      %11 = sbr.rel (0) target = $region5
    $region4: #{model_forward.1} parent=1 // pred_region
      %s13 = ssub.s32 32, 32
      %14 = vsyncadd [#allocation5], %s13
      %17 = dma.hbm_to_smem %s0, 32, [#allocation2], [#allocation5]
    $region5: #{model_forward.1} parent=1 // pred_fallthru
      _
    // Predicated region
    $region6: #{model_forward.1} parent=1 // pred_check
      _
    $region7: #{model_forward.1} parent=1 // pred_check_branch
      %19 = sbr.rel (0) target = $region9
    $region8: #{model_forward.1} parent=1 // pred_region
      %s21 = ssub.s32 128, 128
      %22 = vsyncadd [#allocation3], %s21
      %s24 = sshll.u32 [#allocation6], 4
      %s25 = int_to_ptr.vmem [resolvable:$true] %s24
      %27 = dma.hbm_to_vmem [thread:$0]  %s1, 128, %s25, [#allocation3]
    $region9: #{model_forward.1} parent=1 // pred_fallthru
      _
    // Predicated region
    $region10: #{model_forward.1} parent=1 // pred_check
      _
    $region11: #{model_forward.1} parent=1 // pred_check_branch
      %29 = sbr.rel (0) target = $region13
    $region12: #{model_forward.1} parent=1 // pred_region
      %30 = dma.done [#allocation5], 32
    $region13: #{model_forward.1} parent=1 // pred_fallthru
      _
    // Predicated region
    $region14: #{model_forward.1} parent=1 // pred_check
      _
    $region15: #{model_forward.1} parent=1 // pred_check_branch
      %32 = sbr.rel (0) target = $region17
    $region16: #{model_forward.1} parent=1 // pred_region
      %33 = dma.done [#allocation3], 128
    $region17: #{model_forward.1} parent=1 // pred_fallthru
      _
    %34 = sfence
    %v35 = vld [vmem:[#allocation6] sm:$0x1]
    %v36 = vld [vmem:[#allocation6 + $0x1] sm:$0x1]
    %v37 = vld [vmem:[#allocation6 + $0x2] sm:$0x1]
    %v38 = vld [vmem:[#allocation6 + $0x3] sm:$0x1]
    %v39 = vld [vmem:[#allocation6 + $0x4] sm:$0x1]
    %v40 = vld [vmem:[#allocation6 + $0x5] sm:$0x1]
    %s41 = sld [smem:[#allocation2]]
    %v42 = vstv %s41
    %v43 = vmul.f32 %v42, %v35
    %s44 = sld [smem:[#allocation2 + $0x1]]
    %v45 = vstv %s44
    %v46 = vmul.f32 %v45, %v36
    %v47 = vadd.f32 %v43, %v46
    %s48 = sld [smem:[#allocation2 + $0x2]]
    %v49 = vstv %s48
    %v50 = vmul.f32 %v49, %v37
    %v51 = vadd.f32 %v47, %v50
    %v52 = vadd.f32 %v51, %v38
    %s53 = sld [smem:[#allocation2 + $0x80]]
    %v54 = vstv %s53
    %v55 = vmul.f32 %v54, %v35
    %s56 = sld [smem:[#allocation2 + $0x81]]
    %v57 = vstv %s56
    %v58 = vmul.f32 %v57, %v36
    %v59 = vadd.f32 %v55, %v58
    %s60 = sld [smem:[#allocation2 + $0x82]]
    %v61 = vstv %s60
    %v62 = vmul.f32 %v61, %v37
    %v63 = vadd.f32 %v59, %v62
    %v64 = vadd.f32 %v63, %v38
    %v65 = vadd.f32 %v52, %v64
    %v66 = vmul.f32 %v65, 0.5
    %v67 = vsub.f32 %v52, %v66
    %v68 = vmul.f32 %v67, %v67
    %v69 = vsub.f32 %v64, %v66
    %v70 = vmul.f32 %v69, %v69
    %v71 = vadd.f32 %v68, %v70
    %v72 = vmul.f32 %v71, 0.5
    %v73 = vmax.f32 %v72, 0.0
    %v74 = vadd.f32 %v73, 1e-05
    %v75 = vrsqrt.pop %v74
    %v76 = vmul.f32 %v39, %v75
    %v77 = vmul.f32 %v66, %v76
    %v78 = vsub.f32 %v40, %v77
    %v79 = vmul.f32 %v52, %v76
    %v80 = vadd.f32 %v79, %v78
    %vm81 = vcmask 319488
    %82 = vst.msk [vmem:[#allocation7] sm:$0x1] %vm81, %v80
    %v83 = vmul.f32 %v64, %v76
    %v84 = vadd.f32 %v83, %v78
    %85 = vst.msk [vmem:[#allocation7 + $0x1] sm:$0x1] %vm81, %v84
    // Predicated region
    $region18: #{model_forward.1} parent=1 // pred_check
      _
    $region19: #{model_forward.1} parent=1 // pred_check_branch
      %87 = sbr.rel (0) target = $region21
    $region20: #{model_forward.1} parent=1 // pred_region
      %s89 = ssub.s32 32, 32
      %90 = vsyncadd [#allocation4], %s89
      %s92 = sshll.u32 [#allocation7], 4
      %s93 = int_to_ptr.vmem [resolvable:$true] %s92
      %95 = dma.vmem_to_hbm [thread:$0]  %s93, 32, %s2, [#allocation4]
    $region21: #{model_forward.1} parent=1 // pred_fallthru
      _
    // Predicated region
    $region22: #{model_forward.1} parent=1 // pred_check
      _
    $region23: #{model_forward.1} parent=1 // pred_check_branch
      %97 = sbr.rel (0) target = $region25
    $region24: #{model_forward.1} parent=1 // pred_region
      %98 = dma.done [#allocation4], 32
    $region25: #{model_forward.1} parent=1 // pred_fallthru
      _
    %99 = vsyncpa [#allocation3], 1
    %100 = vsyncpa [#allocation4], 1
    %101 = vsyncpa [#allocation5], 1

</llo_original>
